<compile_context>
chip_gen: v6e
topology: v6e:2x2x1
jax: 0.10.0
libtpu: 0.0.40
codegen_flags: <defaults>
</compile_context>

<pallas_src>
import functools

import jax
import jax.numpy as jnp
from jax.experimental import pallas as pl
from jax.experimental.pallas import tpu as pltpu

BN_EPS = 1e-3


def _downsampler_kernel(qm_ref, *rest, Cin, Cc, Wo, halo):
    # qm_ref : (6*Cin, >=L) bf16  column-expanded row-parity planes, flattened
    #          spatial (r*Wo + b) on lanes; group order
    #          [EE0, EO0, EE1, OE0, OO0, OE1] (taps (0,0)..(1,2)).
    # qh_ref : (6*Cin, Wo) bf16   halo row (only present on the banded path).
    # w0_ref : (Cc, 6*Cin) bf16   BN-folded weights for the kh in {0,1} taps.
    # w1_ref : (Cc, 3*Cin) bf16   BN-folded weights for the kh = 2 taps.
    # cb_ref : (Cc, 1) f32        BN-folded conv bias.
    # psc/psh: (Cin, 1) f32       pool-half folded BN scale / shift.
    # o_ref  : (Cout, L) f32      NCHW-flat output block.
    if halo:
        qh_ref, w0_ref, w1_ref, cb_ref, psc_ref, psh_ref, o_ref = rest
    else:
        w0_ref, w1_ref, cb_ref, psc_ref, psh_ref, o_ref = rest
    L = o_ref.shape[-1]                     # output lanes handled this step

    q = qm_ref[...]                         # (6*Cin, >=L) bf16

    # dh = 0 taps: all six groups at lane offset 0.
    a0 = q[:, 0:L]                          # (6*Cin, L)
    # dh = 1 taps (kh = 2): groups EE0, EO0, EE1 at lane offset +Wo (next row).
    if halo:
        a1 = jnp.concatenate([q[0:3 * Cin, Wo:], qh_ref[0:3 * Cin, :]], axis=1)
    else:
        a1 = q[0:3 * Cin, Wo:Wo + L]        # (3*Cin, L)

    # ---- conv half: two bf16 MXU matmuls, f32 accumulation, BN pre-folded --
    conv = jnp.dot(w0_ref[...], a0, preferred_element_type=jnp.float32)
    conv = conv + jnp.dot(w1_ref[...], a1, preferred_element_type=jnp.float32)
    conv = conv + cb_ref[...]                                       # (Cc, L)

    # ---- pool half: 2x2/stride-2 max == max over taps (1,1),(1,2),(2,1),(2,2)
    # dh=1 pair [EO0; EE1] vs dh=0 pair [OO0; OE1]; f32 elementwise (v5e VPU).
    ph = jnp.maximum(a1[Cin:3 * Cin, :].astype(jnp.float32),
                     q[4 * Cin:6 * Cin, 0:L].astype(jnp.float32))   # (2Cin, L)
    pool = jnp.maximum(ph[0:Cin, :], ph[Cin:2 * Cin, :])            # (Cin, L)
    pool = pool * psc_ref[...] + psh_ref[...]                       # folded BN

    # Single full-block lane-dense store (conv rows then pool rows).
    out = jnp.concatenate([conv, pool], axis=0)                     # (Cout, L)
    o_ref[...] = jnp.maximum(out, 0.0).astype(o_ref.dtype)


def downsampler_block(x_nchw, conv_w, conv_b, gamma, beta, run_mean, run_var):
    """Forward of ERFNet DownsamplerBlock (eval-mode BN).

    x_nchw: (N, Cin, H, W) float32.  Returns (N, Cout, H//2, W//2) NCHW f32.
    """
    N, Cin, H, W = x_nchw.shape
    assert H % 2 == 0 and W % 2 == 0, "DownsamplerBlock kernel needs even H, W"
    Cc = conv_w.shape[0]                    # noutput - ninput
    Cout = Cc + Cin
    Ho, Wo = H // 2, W // 2
    L = Ho * Wo
    Lq = (Ho + 1) * Wo
    dtype = x_nchw.dtype

    # ---- glue: six column-expanded row-parity planes of the padded input ---
    # group g = rp*3 + cs, value [n, c, r, b] = xp[n, c, 2r + rp, 2b + cs].
    # (Only ~1.5x the elements of x, stored bf16 => 0.75x the f32 bytes, vs the
    #  2.25x f32 im2col tensor the previous version round-tripped through HBM.)
    xp = jnp.pad(x_nchw, ((0, 0), (0, 0), (1, 1), (1, 1)))
    grp = [xp[:, :, rp::2, cs:cs + W:2]                 # (N, Cin, Ho+1, Wo)
           for rp in (0, 1) for cs in (0, 1, 2)]
    q = jnp.stack(grp, axis=1).reshape(N, 6 * Cin, Lq).astype(jnp.bfloat16)

    # ---- glue: fold eval-mode BatchNorm (+ conv bias) into weights ----------
    scale = gamma * jax.lax.rsqrt(run_var + BN_EPS)                 # (Cout,)
    wf = conv_w * scale[:Cc, None, None, None]                      # (Cc,Cin,3,3)
    w0 = jnp.transpose(wf[:, :, 0:2, :], (0, 2, 3, 1)).reshape(Cc, 6 * Cin)
    w1 = jnp.transpose(wf[:, :, 2, :], (0, 2, 1)).reshape(Cc, 3 * Cin)
    w0 = w0.astype(jnp.bfloat16)
    w1 = w1.astype(jnp.bfloat16)
    cb = ((conv_b - run_mean[:Cc]) * scale[:Cc] + beta[:Cc]).reshape(Cc, 1)
    cb = cb.astype(jnp.float32)
    psc = scale[Cc:].reshape(Cin, 1).astype(jnp.float32)
    psh = (beta[Cc:] - run_mean[Cc:] * scale[Cc:]).reshape(Cin, 1)
    psh = psh.astype(jnp.float32)

    # ---- tiling: row-bands when Wo is lane-aligned, else full image ---------
    tiled = (Wo % 128 == 0)
    if tiled:
        # Single-buffered bytes per output row (bf16 planes band + f32 out band).
        per_row_bytes = Wo * (6 * Cin * 2 + Cout * 4)
        budget = 8 << 20                                            # per block
        t_max = max(1, budget // per_row_bytes)
        tHo = max(d for d in range(1, Ho + 1) if Ho % d == 0 and d <= t_max)
        if N == 1 and tHo == Ho and Ho > 1:
            # Guarantee >= 2 grid steps so v7x's two TensorCores both get work.
            tHo = max(d for d in range(1, Ho) if Ho % d == 0 and d <= Ho // 2)
        T = Ho // tHo
        Lb = tHo * Wo
        grid = (N, T)
        kernel = functools.partial(_downsampler_kernel,
                                   Cin=Cin, Cc=Cc, Wo=Wo, halo=True)
        in_specs = [
            pl.BlockSpec((None, 6 * Cin, Lb), lambda n, t: (n, 0, t)),
            # halo: the single plane-row right below this band (row (t+1)*tHo)
            pl.BlockSpec((None, 6 * Cin, Wo), lambda n, t: (n, 0, (t + 1) * tHo)),
            pl.BlockSpec((Cc, 6 * Cin), lambda n, t: (0, 0)),
            pl.BlockSpec((Cc, 3 * Cin), lambda n, t: (0, 0)),
            pl.BlockSpec((Cc, 1), lambda n, t: (0, 0)),
            pl.BlockSpec((Cin, 1), lambda n, t: (0, 0)),
            pl.BlockSpec((Cin, 1), lambda n, t: (0, 0)),
        ]
        out_specs = pl.BlockSpec((None, Cout, Lb), lambda n, t: (n, 0, t))
        args = (q, q, w0, w1, cb, psc, psh)
        dims = ("parallel", "parallel")
        # 2x for Pallas double-buffering of I/O blocks + in-kernel temporaries.
        vmem_bytes = (2 * (6 * Cin * (Lb + Wo) * 2 + Cout * Lb * 4)
                      + (Cc + 3 * Cin) * Lb * 4 + (4 << 20))
    else:
        grid = (N,)
        kernel = functools.partial(_downsampler_kernel,
                                   Cin=Cin, Cc=Cc, Wo=Wo, halo=False)
        in_specs = [
            pl.BlockSpec((None, 6 * Cin, Lq), lambda n: (n, 0, 0)),
            pl.BlockSpec((Cc, 6 * Cin), lambda n: (0, 0)),
            pl.BlockSpec((Cc, 3 * Cin), lambda n: (0, 0)),
            pl.BlockSpec((Cc, 1), lambda n: (0, 0)),
            pl.BlockSpec((Cin, 1), lambda n: (0, 0)),
            pl.BlockSpec((Cin, 1), lambda n: (0, 0)),
        ]
        out_specs = pl.BlockSpec((None, Cout, L), lambda n: (n, 0, 0))
        args = (q, w0, w1, cb, psc, psh)
        dims = ("parallel",)
        vmem_bytes = (2 * (6 * Cin * Lq * 2 + Cout * L * 4)
                      + (Cc + 3 * Cin) * L * 4 + (4 << 20))

    # Explicit scoped-VMEM limit: above the v5e 16 MiB default, below v7x's
    # 64 MiB physical per-TensorCore capacity.
    vmem_bytes = int(min(max(vmem_bytes, 32 << 20), 56 << 20))

    out_flat = pl.pallas_call(
        kernel,
        out_shape=jax.ShapeDtypeStruct((N, Cout, L), dtype),
        grid_spec=pltpu.PrefetchScalarGridSpec(
            num_scalar_prefetch=0,
            grid=grid,
            in_specs=in_specs,
            out_specs=out_specs,
        ),
        compiler_params=pltpu.CompilerParams(
            dimension_semantics=dims,
            vmem_limit_bytes=vmem_bytes),
    )(*args)

    return out_flat.reshape(N, Cout, Ho, Wo)            # free reshape


def _reference(x, w, b, gamma, beta, mean, var):
    conv = jax.lax.conv_general_dilated(
        x, w, window_strides=(2, 2), padding=((1, 1), (1, 1)),
        dimension_numbers=("NCHW", "OIHW", "NCHW")) + b[None, :, None, None]
    pool = jax.lax.reduce_window(
        x, -jnp.inf, jax.lax.max,
        window_dimensions=(1, 1, 2, 2), window_strides=(1, 1, 2, 2),
        padding="VALID")
    y = jnp.concatenate([conv, pool], axis=1)
    scale = gamma / jnp.sqrt(var + BN_EPS)
    y = (y - mean[None, :, None, None]) * scale[None, :, None, None] \
        + beta[None, :, None, None]
    return jnp.maximum(y, 0.0)


if __name__ == "__main__":
    def _run_case(N, Cin, Cout, H, W):
        ks = jax.random.split(jax.random.PRNGKey(0), 7)
        Cc = Cout - Cin
        x = jax.random.normal(ks[0], (N, Cin, H, W), jnp.float32)
        conv_w = 0.1 * jax.random.normal(ks[1], (Cc, Cin, 3, 3), jnp.float32)
        conv_b = 0.1 * jax.random.normal(ks[2], (Cc,), jnp.float32)
        gamma = 1.0 + 0.1 * jax.random.normal(ks[3], (Cout,), jnp.float32)
        beta = 0.1 * jax.random.normal(ks[4], (Cout,), jnp.float32)
        run_mean = 0.1 * jax.random.normal(ks[5], (Cout,), jnp.float32)
        run_var = jnp.abs(jax.random.normal(ks[6], (Cout,), jnp.float32)) + 0.5

        out = downsampler_block(x, conv_w, conv_b, gamma, beta,
                                run_mean, run_var)
        out = jax.block_until_ready(out)
        assert out.shape == (N, Cout, H // 2, W // 2), out.shape

        ref = _reference(x, conv_w, conv_b, gamma, beta, run_mean, run_var)
        max_err = float(jnp.max(jnp.abs(out - ref)))
        # bf16 matmul operands + bf16-quantized pool inputs -> ~1e-2 level
        # absolute error vs the f32 reference.
        assert max_err < 5e-2, f"max abs error {max_err}"

    # DownsamplerBlock(ninput=4, noutput=16), small image: full-block path.
    _run_case(N=2, Cin=4, Cout=16, H=16, W=16)
    # Wider image: exercises the banded (lane-tiled, halo) path.
    _run_case(N=1, Cin=4, Cout=16, H=16, W=256)
    print("KERNEL_OK")
</pallas_src>

<mosaic_0001>
module attributes {stable_mosaic.version = 11 : i64} {
  func.func @_downsampler_kernel(%arg0: i32, %arg1: memref<1x24x72xbf16, #tpu.memory_space<vmem>>, %arg2: memref<12x24xbf16, #tpu.memory_space<vmem>>, %arg3: memref<12x12xbf16, #tpu.memory_space<vmem>>, %arg4: memref<12x1xf32, #tpu.memory_space<vmem>>, %arg5: memref<4x1xf32, #tpu.memory_space<vmem>>, %arg6: memref<4x1xf32, #tpu.memory_space<vmem>>, %arg7: memref<1x16x64xf32, #tpu.memory_space<vmem>>) attributes {dimension_semantics = [#tpu.dimension_semantics<parallel>], iteration_bounds = array<i64: 2>, scalar_prefetch = 0 : i64, scratch_operands = 0 : i64, tpu.core_type = #tpu.core_type<tc>, window_params = [{transform_indices = @transform_0, window_bounds = array<i64: 1, 24, 72>}, {pipeline_mode = #tpu.pipeline_mode<synchronous>, transform_indices = @transform_1, window_bounds = array<i64: 12, 24>}, {pipeline_mode = #tpu.pipeline_mode<synchronous>, transform_indices = @transform_2, window_bounds = array<i64: 12, 12>}, {pipeline_mode = #tpu.pipeline_mode<synchronous>, transform_indices = @transform_3, window_bounds = array<i64: 12, 1>}, {pipeline_mode = #tpu.pipeline_mode<synchronous>, transform_indices = @transform_4, window_bounds = array<i64: 4, 1>}, {pipeline_mode = #tpu.pipeline_mode<synchronous>, transform_indices = @transform_5, window_bounds = array<i64: 4, 1>}, {transform_indices = @transform_6, window_bounds = array<i64: 1, 16, 64>}]} {
    %c0 = arith.constant 0 : index
    %c0_0 = arith.constant 0 : index
    %c0_1 = arith.constant 0 : index
    %0 = vector.load %arg1[%c0, %c0_0, %c0_1] : memref<1x24x72xbf16, #tpu.memory_space<vmem>>, vector<1x24x72xbf16>
    %1 = vector.shape_cast %0 : vector<1x24x72xbf16> to vector<24x72xbf16>
    %2 = vector.extract_strided_slice %1 {offsets = [0, 0], sizes = [24, 64], strides = [1, 1]} : vector<24x72xbf16> to vector<24x64xbf16>
    %3 = vector.extract_strided_slice %1 {offsets = [0, 8], sizes = [12, 64], strides = [1, 1]} : vector<24x72xbf16> to vector<12x64xbf16>
    %c0_2 = arith.constant 0 : index
    %c0_3 = arith.constant 0 : index
    %4 = vector.load %arg2[%c0_2, %c0_3] : memref<12x24xbf16, #tpu.memory_space<vmem>>, vector<12x24xbf16>
    %cst = arith.constant dense<0.000000e+00> : vector<12x64xf32>
    %5 = tpu.matmul %4, %2, %cst {dimension_numbers = #tpu.dot_dimension_numbers<[1], [0], [0], [1], [0, 0, 1, 1], [], []>} : vector<12x24xbf16>, vector<24x64xbf16>, vector<12x64xf32> -> vector<12x64xf32>
    %c0_4 = arith.constant 0 : index
    %c0_5 = arith.constant 0 : index
    %6 = vector.load %arg3[%c0_4, %c0_5] : memref<12x12xbf16, #tpu.memory_space<vmem>>, vector<12x12xbf16>
    %cst_6 = arith.constant dense<0.000000e+00> : vector<12x64xf32>
    %7 = tpu.matmul %6, %3, %cst_6 {dimension_numbers = #tpu.dot_dimension_numbers<[1], [0], [0], [1], [0, 0, 1, 1], [], []>} : vector<12x12xbf16>, vector<12x64xbf16>, vector<12x64xf32> -> vector<12x64xf32>
    %8 = arith.addf %5, %7 : vector<12x64xf32>
    %c0_7 = arith.constant 0 : index
    %c0_8 = arith.constant 0 : index
    %9 = vector.load %arg4[%c0_7, %c0_8] : memref<12x1xf32, #tpu.memory_space<vmem>>, vector<12x1xf32>
    %10 = vector.broadcast %9 : vector<12x1xf32> to vector<12x64xf32>
    %11 = arith.addf %8, %10 : vector<12x64xf32>
    %12 = vector.extract_strided_slice %3 {offsets = [4, 0], sizes = [8, 64], strides = [1, 1]} : vector<12x64xbf16> to vector<8x64xbf16>
    %13 = arith.extf %12 : vector<8x64xbf16> to vector<8x64xf32>
    %14 = vector.extract_strided_slice %1 {offsets = [16, 0], sizes = [8, 64], strides = [1, 1]} : vector<24x72xbf16> to vector<8x64xbf16>
    %15 = arith.extf %14 : vector<8x64xbf16> to vector<8x64xf32>
    %16 = arith.maximumf %13, %15 : vector<8x64xf32>
    %17 = vector.extract_strided_slice %16 {offsets = [0, 0], sizes = [4, 64], strides = [1, 1]} : vector<8x64xf32> to vector<4x64xf32>
    %18 = vector.extract_strided_slice %16 {offsets = [4, 0], sizes = [4, 64], strides = [1, 1]} : vector<8x64xf32> to vector<4x64xf32>
    %19 = arith.maximumf %17, %18 : vector<4x64xf32>
    %c0_9 = arith.constant 0 : index
    %c0_10 = arith.constant 0 : index
    %20 = vector.load %arg5[%c0_9, %c0_10] : memref<4x1xf32, #tpu.memory_space<vmem>>, vector<4x1xf32>
    %21 = vector.broadcast %20 : vector<4x1xf32> to vector<4x64xf32>
    %22 = arith.mulf %19, %21 : vector<4x64xf32>
    %c0_11 = arith.constant 0 : index
    %c0_12 = arith.constant 0 : index
    %23 = vector.load %arg6[%c0_11, %c0_12] : memref<4x1xf32, #tpu.memory_space<vmem>>, vector<4x1xf32>
    %24 = vector.broadcast %23 : vector<4x1xf32> to vector<4x64xf32>
    %25 = arith.addf %22, %24 : vector<4x64xf32>
    %26 = tpu.concatenate %11, %25 in 0 : vector<12x64xf32>, vector<4x64xf32> -> vector<16x64xf32>
    %cst_13 = arith.constant 0.000000e+00 : f32
    %27 = vector.broadcast %cst_13 : f32 to vector<16x64xf32>
    %28 = arith.maximumf %26, %27 : vector<16x64xf32>
    %c0_14 = arith.constant 0 : index
    %c0_15 = arith.constant 0 : index
    %c0_16 = arith.constant 0 : index
    %29 = vector.load %arg7[%c0_14, %c0_15, %c0_16] : memref<1x16x64xf32, #tpu.memory_space<vmem>>, vector<1x16x64xf32>
    %30 = vector.shape_cast %29 : vector<1x16x64xf32> to vector<16x64xf32>
    %31 = vector.shape_cast %28 : vector<16x64xf32> to vector<1x16x64xf32>
    tpu.vector_store %arg7[%c0_14, %c0_15, %c0_16], %31 {strides = array<i32>} : memref<1x16x64xf32, #tpu.memory_space<vmem>>, vector<1x16x64xf32>,
    return
  }
  func.func @transform_0(%arg0: i32) -> (i32, i32, i32) {
    %c0_i32 = arith.constant 0 : i32
    %c0_i32_0 = arith.constant 0 : i32
    %c0_i32_1 = arith.constant 0 : i32
    return %arg0, %c0_i32, %c0_i32_0 : i32, i32, i32
  }
  func.func @transform_1(%arg0: i32) -> (i32, i32) {
    %c0_i32 = arith.constant 0 : i32
    %c0_i32_0 = arith.constant 0 : i32
    %c0_i32_1 = arith.constant 0 : i32
    return %c0_i32, %c0_i32_0 : i32, i32
  }
  func.func @transform_2(%arg0: i32) -> (i32, i32) {
    %c0_i32 = arith.constant 0 : i32
    %c0_i32_0 = arith.constant 0 : i32
    %c0_i32_1 = arith.constant 0 : i32
    return %c0_i32, %c0_i32_0 : i32, i32
  }
  func.func @transform_3(%arg0: i32) -> (i32, i32) {
    %c0_i32 = arith.constant 0 : i32
    %c0_i32_0 = arith.constant 0 : i32
    %c0_i32_1 = arith.constant 0 : i32
    return %c0_i32, %c0_i32_0 : i32, i32
  }
  func.func @transform_4(%arg0: i32) -> (i32, i32) {
    %c0_i32 = arith.constant 0 : i32
    %c0_i32_0 = arith.constant 0 : i32
    %c0_i32_1 = arith.constant 0 : i32
    return %c0_i32, %c0_i32_0 : i32, i32
  }
  func.func @transform_5(%arg0: i32) -> (i32, i32) {
    %c0_i32 = arith.constant 0 : i32
    %c0_i32_0 = arith.constant 0 : i32
    %c0_i32_1 = arith.constant 0 : i32
    return %c0_i32, %c0_i32_0 : i32, i32
  }
  func.func @transform_6(%arg0: i32) -> (i32, i32, i32) {
    %c0_i32 = arith.constant 0 : i32
    %c0_i32_0 = arith.constant 0 : i32
    %c0_i32_1 = arith.constant 0 : i32
    return %arg0, %c0_i32, %c0_i32_0 : i32, i32, i32
  }
}

</mosaic_0001>

<llo_original>
// kernel: tpu_custom_call.1
$region0: #{tpu_custom_call.1}
  #allocation0 [shape = 'u32[]', space=smem, size = 0x4, offset = 0x4, fixed_abs, tag = 'smem constant byte address 0x4 - core index']
  #allocation1 [shape = 'u32[144,128]{1,0:T(1,128)}', space=vmem, size = 0x12000, scoped, tag = 'internal scratch']
  %s0 = inlined_call_operand.vmem [shape: bf16[2,24,72], index: 0, kind: input, shape index: {}]
  %s1 = inlined_call_operand.hbm [shape: bf16[12,24], index: 1, kind: input, shape index: {}]
  %s2 = inlined_call_operand.hbm [shape: bf16[12,12], index: 2, kind: input, shape index: {}]
  %s3 = inlined_call_operand.vmem [shape: f32[12,1], index: 3, kind: input, shape index: {}]
  %s4 = inlined_call_operand.vmem [shape: f32[4,1], index: 4, kind: input, shape index: {}]
  %s5 = inlined_call_operand.vmem [shape: f32[4,1], index: 5, kind: input, shape index: {}]
  %s6 = inlined_call_operand.hbm [shape: f32[2,16,64], index: 6, kind: output, shape index: {}]
  %s7 = sld [smem:[#allocation0]]
  $region65: #{tpu_custom_call.1} parent=0
    _
  %s9 = ssub.s32 1, %s7
  %s10 = scalar_select 0, %s9, %s7
  $region1: #{tpu_custom_call.1} parent=0
    #allocation2 [shape = 'u8[4096]{0}', space=vmem, size = 0x1000, scoped, tag = 'input window, operand 1, single buffered']
    #allocation3 [shape = 's32[2]{0}', space=sflag, size = 0x8, scoped, tag = 'scoped memory for tpu_custom_call.1']
    #allocation4 [shape = 's32[2]{0}', space=sflag, size = 0x8, scoped, tag = 'scoped memory for tpu_custom_call.1']
    #allocation5 [shape = 'u8[4096]{0}', space=vmem, size = 0x1000, scoped, tag = 'input window, operand 2, single buffered']
    #allocation6 [shape = 's32[1]{0}', space=sflag, size = 0x4, scoped, tag = 'scoped memory for tpu_custom_call.1']
    #allocation7 [shape = 'u8[16384]{0}', space=vmem, size = 0x4000, scoped, tag = 'output window, operand 0']
    %11 = vsyncpa [#allocation3], 0
    %12 = vsyncpa [#allocation6], 0
    %13 = vsyncpa [#allocation4], 0
    %s14 = scalar_lea.sflag [#allocation4], 1
    %15 = vsyncpa %s14, 0
    loop: start=0, step=1, limit=4
    $region2: #{tpu_custom_call.1} parent=1 // loop_pre_header
      _
    $region3: #{tpu_custom_call.1} parent=1 // loop_header
      %s17 = sphi 0, %s21
      %p18 = scmp.ge.s32.totalorder %s17, 4
      %s27 = sphi 0, %s29
      %s30 = sphi 0, %s27
      %s31 = sphi 0, %s30
      %s47 = sphi 0, %s31
      %s51 = sphi 0, %s51
      %s53 = sphi 0, %s51
      %s54 = sphi 0, %s53
      %s68 = sphi 0, %s54
      %s72 = sphi 0, %s72
      %s74 = sphi 0, %s72
      %s75 = sphi 0, %s74
      %s89 = sphi 0, %s75
      %s93 = sphi 0, %s93
      %s95 = sphi 0, %s93
      %s96 = sphi 0, %s95
      %s110 = sphi 0, %s96
      %s114 = sphi 0, %s114
      %s116 = sphi 0, %s114
      %s117 = sphi 0, %s116
      %s131 = sphi 0, %s117
      %s135 = sphi 0, %s135
      %s137 = sphi 0, %s135
      %s138 = sphi 0, %s137
      %s152 = sphi 0, %s138
      %s158 = sphi 0, %s160
      %s161 = sphi 0, %s158
      %s162 = sphi 0, %s161
      %s178 = sphi 0, %s162
    $region4: #{tpu_custom_call.1} parent=1 // loop_header_branch
      %20 = sbr.rel (%p18) target = $region8
    $region5: #{tpu_custom_call.1} parent=1 // loop_body
      %s22 = ssub.s32 %s17, 1
      %s23 = ssub.s32 %s17, 2
      %s24 = sadd.s32 %s17, 1
      %s25 = ssub.s32 %s17, %s24
      %p26 = scmp.eq.s32.totalorder %s25, 0
      %s28 = sadd.s32 %s27, 1
      %s29 = scalar_select %p26, %s27, %s28
      %p32 = pneg %p26
      %p33 = scmp.eq.s32.totalorder %s17, 1
      %p34 = por %p32, %p33
      %p35 = scmp.ne.s32.totalorder %s27, %s30
      %p36 = scmp.eq.s32.totalorder %s17, 0
      %p37 = por %p35, %p36
      %p38 = scmp.ne.s32.totalorder %s27, %s30
      %p39 = scmp.eq.s32.totalorder %s22, 1
      %p40 = por %p38, %p39
      %p41 = scmp.ne.s32.totalorder %s30, %s31
      %p42 = scmp.eq.s32.totalorder %s22, 0
      %p43 = por %p41, %p42
      %p44 = scmp.ne.s32.totalorder %s30, %s31
      %p45 = scmp.eq.s32.totalorder %s23, 1
      %p46 = por %p44, %p45
      %p48 = scmp.ne.s32.totalorder %s31, %s47
      %p49 = scmp.eq.s32.totalorder %s23, 0
      %p50 = por %p48, %p49
      %s52 = sadd.s32 %s51, 1
      %p55 = scmp.eq.s32.totalorder %s17, 1
      %p56 = scmp.ne.s32.totalorder %s51, %s53
      %p57 = scmp.eq.s32.totalorder %s17, 0
      %p58 = por %p56, %p57
      %p59 = scmp.ne.s32.totalorder %s51, %s53
      %p60 = scmp.eq.s32.totalorder %s22, 1
      %p61 = por %p59, %p60
      %p62 = scmp.ne.s32.totalorder %s53, %s54
      %p63 = scmp.eq.s32.totalorder %s22, 0
      %p64 = por %p62, %p63
      %p65 = scmp.ne.s32.totalorder %s53, %s54
      %p66 = scmp.eq.s32.totalorder %s23, 1
      %p67 = por %p65, %p66
      %p69 = scmp.ne.s32.totalorder %s54, %s68
      %p70 = scmp.eq.s32.totalorder %s23, 0
      %p71 = por %p69, %p70
      %s73 = sadd.s32 %s72, 1
      %p76 = scmp.eq.s32.totalorder %s17, 1
      %p77 = scmp.ne.s32.totalorder %s72, %s74
      %p78 = scmp.eq.s32.totalorder %s17, 0
      %p79 = por %p77, %p78
      %p80 = scmp.ne.s32.totalorder %s72, %s74
      %p81 = scmp.eq.s32.totalorder %s22, 1
      %p82 = por %p80, %p81
      %p83 = scmp.ne.s32.totalorder %s74, %s75
      %p84 = scmp.eq.s32.totalorder %s22, 0
      %p85 = por %p83, %p84
      %p86 = scmp.ne.s32.totalorder %s74, %s75
      %p87 = scmp.eq.s32.totalorder %s23, 1
      %p88 = por %p86, %p87
      %p90 = scmp.ne.s32.totalorder %s75, %s89
      %p91 = scmp.eq.s32.totalorder %s23, 0
      %p92 = por %p90, %p91
      %s94 = sadd.s32 %s93, 1
      %p97 = scmp.eq.s32.totalorder %s17, 1
      %p98 = scmp.ne.s32.totalorder %s93, %s95
      %p99 = scmp.eq.s32.totalorder %s17, 0
      %p100 = por %p98, %p99
      %p101 = scmp.ne.s32.totalorder %s93, %s95
      %p102 = scmp.eq.s32.totalorder %s22, 1
      %p103 = por %p101, %p102
      %p104 = scmp.ne.s32.totalorder %s95, %s96
      %p105 = scmp.eq.s32.totalorder %s22, 0
      %p106 = por %p104, %p105
      %p107 = scmp.ne.s32.totalorder %s95, %s96
      %p108 = scmp.eq.s32.totalorder %s23, 1
      %p109 = por %p107, %p108
      %p111 = scmp.ne.s32.totalorder %s96, %s110
      %p112 = scmp.eq.s32.totalorder %s23, 0
      %p113 = por %p111, %p112
      %s115 = sadd.s32 %s114, 1
      %p118 = scmp.eq.s32.totalorder %s17, 1
      %p119 = scmp.ne.s32.totalorder %s114, %s116
      %p120 = scmp.eq.s32.totalorder %s17, 0
      %p121 = por %p119, %p120
      %p122 = scmp.ne.s32.totalorder %s114, %s116
      %p123 = scmp.eq.s32.totalorder %s22, 1
      %p124 = por %p122, %p123
      %p125 = scmp.ne.s32.totalorder %s116, %s117
      %p126 = scmp.eq.s32.totalorder %s22, 0
      %p127 = por %p125, %p126
      %p128 = scmp.ne.s32.totalorder %s116, %s117
      %p129 = scmp.eq.s32.totalorder %s23, 1
      %p130 = por %p128, %p129
      %p132 = scmp.ne.s32.totalorder %s117, %s131
      %p133 = scmp.eq.s32.totalorder %s23, 0
      %p134 = por %p132, %p133
      %s136 = sadd.s32 %s135, 1
      %p139 = scmp.eq.s32.totalorder %s17, 1
      %p140 = scmp.ne.s32.totalorder %s135, %s137
      %p141 = scmp.eq.s32.totalorder %s17, 0
      %p142 = por %p140, %p141
      %p143 = scmp.ne.s32.totalorder %s135, %s137
      %p144 = scmp.eq.s32.totalorder %s22, 1
      %p145 = por %p143, %p144
      %p146 = scmp.ne.s32.totalorder %s137, %s138
      %p147 = scmp.eq.s32.totalorder %s22, 0
      %p148 = por %p146, %p147
      %p149 = scmp.ne.s32.totalorder %s137, %s138
      %p150 = scmp.eq.s32.totalorder %s23, 1
      %p151 = por %p149, %p150
      %p153 = scmp.ne.s32.totalorder %s138, %s152
      %p154 = scmp.eq.s32.totalorder %s23, 0
      %p155 = por %p153, %p154
      %s156 = ssub.s32 %s17, %s24
      %p157 = scmp.eq.s32.totalorder %s156, 0
      %s159 = sadd.s32 %s158, 1
      %s160 = scalar_select %p157, %s158, %s159
      %p163 = pneg %p157
      %p164 = scmp.eq.s32.totalorder %s17, 1
      %p165 = por %p163, %p164
      %p166 = scmp.ne.s32.totalorder %s158, %s161
      %p167 = scmp.eq.s32.totalorder %s17, 0
      %p168 = por %p166, %p167
      %p169 = scmp.ne.s32.totalorder %s158, %s161
      %p170 = scmp.eq.s32.totalorder %s22, 1
      %p171 = por %p169, %p170
      %p172 = scmp.ne.s32.totalorder %s161, %s162
      %p173 = scmp.eq.s32.totalorder %s22, 0
      %p174 = por %p172, %p173
      %p175 = scmp.ne.s32.totalorder %s161, %s162
      %p176 = scmp.eq.s32.totalorder %s23, 1
      %p177 = por %p175, %p176
      %p179 = scmp.ne.s32.totalorder %s162, %s178
      %p180 = scmp.eq.s32.totalorder %s23, 0
      %p181 = por %p179, %p180
      %p182 = scmp.le.s32.totalorder 1, %s17
      %p183 = scmp.lt.s32.totalorder %s17, 3
      %p184 = pnand %p182, %p183
      %p185 = pneg %p184
      // Predicated region
      $region9: #{tpu_custom_call.1} parent=5 // pred_check
        _
      $region10: #{tpu_custom_call.1} parent=5 // pred_check_branch
        %187 = sbr.rel (%p184) target = $region12
      $region11: #{tpu_custom_call.1} parent=5 // pred_region
        %s188 = ssub.s32 %s17, 1
        // Predicated region
        $region13: #{tpu_custom_call.1} parent=11 // pred_check
          %p189 = pneg %p64
        $region14: #{tpu_custom_call.1} parent=11 // pred_check_branch
          %191 = sbr.rel (%p189) target = $region16
        $region15: #{tpu_custom_call.1} parent=11 // pred_region
          %s193 = ssub.s32 128, 128
          %194 = vsyncadd [#allocation3], %s193
          %s195 = sshll.u32 [#allocation2], 4
          %s196 = int_to_ptr.vmem [resolvable:$true] %s195
          %201 = dma.hbm_to_vmem [thread:$0]  %s1, 128, %s196, [#allocation3], 64, 64, 4
        $region16: #{tpu_custom_call.1} parent=11 // pred_fallthru
          _
        // Predicated region
        $region17: #{tpu_custom_call.1} parent=11 // pred_check
          %p202 = pneg %p85
        $region18: #{tpu_custom_call.1} parent=11 // pred_check_branch
          %204 = sbr.rel (%p202) target = $region20
        $region19: #{tpu_custom_call.1} parent=11 // pred_region
          %s206 = ssub.s32 128, 128
          %207 = vsyncadd [#allocation6], %s206
          %s208 = sshll.u32 [#allocation5], 4
          %s209 = int_to_ptr.vmem [resolvable:$true] %s208
          %214 = dma.hbm_to_vmem [thread:$0]  %s2, 128, %s209, [#allocation6], 64, 64, 4
        $region20: #{tpu_custom_call.1} parent=11 // pred_fallthru
          _
        // Predicated region
        $region21: #{tpu_custom_call.1} parent=11 // pred_check
          %p215 = pneg %p106
        $region22: #{tpu_custom_call.1} parent=11 // pred_check_branch
          %217 = sbr.rel (%p215) target = $region24
        $region23: #{tpu_custom_call.1} parent=11 // pred_region
          _
        $region24: #{tpu_custom_call.1} parent=11 // pred_fallthru
          _
        // Predicated region
        $region25: #{tpu_custom_call.1} parent=11 // pred_check
          %p218 = pneg %p127
        $region26: #{tpu_custom_call.1} parent=11 // pred_check_branch
          %220 = sbr.rel (%p218) target = $region28
        $region27: #{tpu_custom_call.1} parent=11 // pred_region
          _
        $region28: #{tpu_custom_call.1} parent=11 // pred_fallthru
          _
        // Predicated region
        $region29: #{tpu_custom_call.1} parent=11 // pred_check
          %p221 = pneg %p148
        $region30: #{tpu_custom_call.1} parent=11 // pred_check_branch
          %223 = sbr.rel (%p221) target = $region32
        $region31: #{tpu_custom_call.1} parent=11 // pred_region
          _
        $region32: #{tpu_custom_call.1} parent=11 // pred_fallthru
          _
      $region12: #{tpu_custom_call.1} parent=5 // pred_fallthru
        _
      %p224 = scmp.lt.s32.totalorder %s17, 2
      // Predicated region
      $region33: #{tpu_custom_call.1} parent=5 // pred_check
        %p225 = pneg %p224
      $region34: #{tpu_custom_call.1} parent=5 // pred_check_branch
        %227 = sbr.rel (%p225) target = $region36
      $region35: #{tpu_custom_call.1} parent=5 // pred_region
        // Predicated region
        $region37: #{tpu_custom_call.1} parent=35 // pred_check
          %p228 = pneg %p37
        $region38: #{tpu_custom_call.1} parent=35 // pred_check_branch
          %230 = sbr.rel (%p228) target = $region40
        $region39: #{tpu_custom_call.1} parent=35 // pred_region
          %p231 = scmp.lt.s32.totalorder %s17, 1
          %s232 = scalar_select %p231, %s17, 1
          %s233 = smul.addr %s232, 3
          %s234 = smul.addr %s233, 4
          %s235 = scalar_lea.vmem %s0, %s234
        $region40: #{tpu_custom_call.1} parent=35 // pred_fallthru
          _
      $region36: #{tpu_custom_call.1} parent=5 // pred_fallthru
        _
      %p236 = scmp.le.s32.totalorder 1, %s17
      %p237 = scmp.lt.s32.totalorder %s17, 3
      %p238 = pnand %p236, %p237
      %p239 = pneg %p238
      // Predicated region
      $region41: #{tpu_custom_call.1} parent=5 // pred_check
        _
      $region42: #{tpu_custom_call.1} parent=5 // pred_check_branch
        %241 = sbr.rel (%p238) target = $region44
      $region43: #{tpu_custom_call.1} parent=5 // pred_region
        %s242 = ssub.s32 %s17, 1
        // Predicated region
        $region45: #{tpu_custom_call.1} parent=43 // pred_check
          %p243 = pneg %p64
        $region46: #{tpu_custom_call.1} parent=43 // pred_check_branch
          %245 = sbr.rel (%p243) target = $region48
        $region47: #{tpu_custom_call.1} parent=43 // pred_region
          %246 = dma.done [#allocation3], 128
        $region48: #{tpu_custom_call.1} parent=43 // pred_fallthru
          _
        // Predicated region
        $region49: #{tpu_custom_call.1} parent=43 // pred_check
          %p247 = pneg %p85
        $region50: #{tpu_custom_call.1} parent=43 // pred_check_branch
          %249 = sbr.rel (%p247) target = $region52
        $region51: #{tpu_custom_call.1} parent=43 // pred_region
          %250 = dma.done [#allocation6], 128
        $region52: #{tpu_custom_call.1} parent=43 // pred_fallthru
          _
        %p251 = scmp.lt.s32.totalorder %s22, 1
        %s252 = scalar_select %p251, %s22, 1
        %s253 = smul.addr %s252, 3
        %s254 = smul.addr %s253, 4
        %s255 = scalar_lea.vmem %s0, %s254
        %p256 = pneg %p43
        %p257 = pneg %p40
        %p258 = pneg %p64
        %p259 = pneg %p61
        %p260 = pneg %p85
        %p261 = pneg %p82
        %p262 = pneg %p106
        %p263 = pneg %p103
        %p264 = pneg %p127
        %p265 = pneg %p124
        %p266 = pneg %p148
        %p267 = pneg %p145
        %p268 = pneg %p174
        %p269 = pneg %p171
        %s270 = sand.u32 %s161, 1
        %s271 = scalar_lea.sflag [#allocation4], %s270
        %s272 = sand.u32 %s161, 1
        %s273 = smul.addr %s272, 16
        %s274 = scalar_lea.vmem [#allocation7], %s273
        %p275 = scmp.lt.s32.totalorder %s22, 1
        %s276 = scalar_select %p275, %s22, 1
        %s277 = smul.addr %s276, 3
        %s278 = smul.addr %s277, 4
        %s279 = scalar_lea.vmem %s0, %s278
        %v281 = vld [vmem:[%s279] sm:$0xf]
        %v282 = vld [vmem:[%s279 + $0x4] sm:$0xf]
        %v283 = vld [vmem:[%s279 + $0x8] sm:$0xf]
        %v284 = vld [vmem:[#allocation2] sm:$0xf]
        %v285 = vld [vmem:[#allocation2 + $0x4] sm:$0x3]
        %v286 = vld [vmem:[#allocation5] sm:$0xf]
        %v287 = vld [vmem:[#allocation5 + $0x4] sm:$0x3]
        %v290 = vunpack.c.l.b16 %v286
        %v291 = vunpack.c.l.b16 %v287
        %v292 = vpack.c.b16 %v291, %v290
        %v295 = vunpack.c.l.b16 %v281
        %v296 = vunpack.c.l.b16 %v282
        %v297 = vpack.c.b16 %v296, %v295
        %298 = vrot.lane.b32.xlu0 %v297, 120
        %v299 = vpop.permute.xlu0 %298
        %vm300 = vcmask 97280
        %v302 = vsel %vm300, %v292, 0
        %vm304 = vcmask 1045504
        %v306 = vsel %vm304, %v299, 0
        %308 = vmatprep.subr.bf16.mxu0 0
        %309 = vmatpush1.bf16.msra.mxu0 0
        %310 = vmatprep.subr.bf16.mxu0 0
        %311 = vmatpush1.bf16.msra.mxu0 0
        %312 = vmatprep.subr.bf16.mxu0 0
        %313 = vmatpush1.bf16.msra.mxu0 0
        %314 = vmatprep.subr.bf16.mxu0 0
        %315 = vmatpush1.bf16.msra.mxu0 0
        %316 = vmatprep.subr.bf16.mxu0 0
        %317 = vmatpush1.bf16.msra.mxu0 0
        %318 = vmatprep.subr.bf16.mxu0 0
        %319 = vmatpush1.bf16.msra.mxu0 0
        %320 = vmatprep.subr.bf16.mxu0 0
        %321 = vmatpush1.bf16.msra.mxu0 0
        %322 = vmatprep.subr.bf16.mxu0 0
        %323 = vmatpush1.bf16.msra.mxu0 %v306
        %324 = vmatprep.subr.bf16.mxu0 0
        %325 = vmatpush2.bf16.msra.mxu0 0
        %326 = vmatprep.subr.bf16.mxu0 0
        %327 = vmatpush2.bf16.msra.mxu0 0
        %328 = vmatprep.subr.bf16.mxu0 0
        %329 = vmatpush2.bf16.msra.mxu0 0
        %330 = vmatprep.subr.bf16.mxu0 0
        %331 = vmatpush2.bf16.msra.mxu0 0
        %332 = vmatprep.subr.bf16.mxu0 0
        %333 = vmatpush2.bf16.msra.mxu0 0
        %334 = vmatprep.subr.bf16.mxu0 0
        %335 = vmatpush2.bf16.msra.mxu0 0
        %336 = vmatprep.subr.bf16.mxu0 0
        %337 = vmatpush2.bf16.msra.mxu0 0
        %338 = vmatprep.subr.bf16.mxu0 0
        %339 = vmatpush2.bf16.msra.mxu0 0
        %340 = vmatprep.mubr.bf16.mxu0 0
        %341 = vmatmul.mubr.bf16.gmra.mxu0 %v302
        %v342 = vpop.f32.mrf.mxu0
        %v343 = vadd.f32 0.0, %v342
        %v344 = vpop.f32.mrf.mxu0
        %v345 = vpop.f32.mrf.mxu0
        %v346 = vadd.f32 0.0, %v345
        %v347 = vpop.f32.mrf.mxu0
        %348 = vdwg.mxu0
        %v351 = vunpack.c.l.b16 %v284
        %v352 = vunpack.c.l.b16 %v285
        %v353 = vpack.c.b16 %v352, %v351
        %v355 = vunpack.c.l.b16 %v283
        %v356 = vpack.c.b16 %v355, %v355
        %vm358 = vcmask 195584
        %v360 = vsel %vm358, %v353, 0
        %vm362 = vcmask 1043456
        %v364 = vsel %vm362, %v356, 0
        %366 = vmatprep.subr.bf16.mxu0 0
        %367 = vmatpush1.bf16.msra.mxu0 0
        %368 = vmatprep.subr.bf16.mxu0 0
        %369 = vmatpush1.bf16.msra.mxu0 0
        %370 = vmatprep.subr.bf16.mxu0 0
        %371 = vmatpush1.bf16.msra.mxu0 0
        %372 = vmatprep.subr.bf16.mxu0 0
        %373 = vmatpush1.bf16.msra.mxu0 0
        %374 = vmatprep.subr.bf16.mxu0 0
        %375 = vmatpush1.bf16.msra.mxu0 0
        %376 = vmatprep.subr.bf16.mxu0 0
        %377 = vmatpush1.bf16.msra.mxu0 0
        %378 = vmatprep.subr.bf16.mxu0 0
        %379 = vmatpush1.bf16.msra.mxu0 %v364
        %380 = vmatprep.subr.bf16.mxu0 0
        %381 = vmatpush1.bf16.msra.mxu0 %v297
        %382 = vmatprep.subr.bf16.mxu0 0
        %383 = vmatpush2.bf16.msra.mxu0 0
        %384 = vmatprep.subr.bf16.mxu0 0
        %385 = vmatpush2.bf16.msra.mxu0 0
        %386 = vmatprep.subr.bf16.mxu0 0
        %387 = vmatpush2.bf16.msra.mxu0 0
        %388 = vmatprep.subr.bf16.mxu0 0
        %389 = vmatpush2.bf16.msra.mxu0 0
        %390 = vmatprep.subr.bf16.mxu0 0
        %391 = vmatpush2.bf16.msra.mxu0 0
        %392 = vmatprep.subr.bf16.mxu0 0
        %393 = vmatpush2.bf16.msra.mxu0 0
        %394 = vmatprep.subr.bf16.mxu0 0
        %395 = vmatpush2.bf16.msra.mxu0 0
        %396 = vmatprep.subr.bf16.mxu0 0
        %397 = vmatpush2.bf16.msra.mxu0 0
        %398 = vmatprep.mubr.bf16.mxu0 0
        %399 = vmatmul.mubr.bf16.gmra.mxu0 %v360
        %v400 = vpop.f32.mrf.mxu0
        %v401 = vadd.f32 %v343, %v400
        %v402 = vpop.f32.mrf.mxu0
        %v403 = vpop.f32.mrf.mxu0
        %v404 = vadd.f32 %v346, %v403
        %v405 = vpop.f32.mrf.mxu0
        %406 = vdwg.mxu0
        %v407 = vld [vmem:[%s3] sm:$0xff]
        %v408 = vld [vmem:[%s3 + $0x8] sm:$0xf]
        %410 = vset.pattern.permute.xlu0 0
        %411 = vperm.xlu0 %410, %v407
        %v412 = vpop.permute.xlu0 %411
        %415 = vset.pattern.permute.xlu0 0
        %416 = vperm.xlu0 %415, %v408
        %v417 = vpop.permute.xlu0 %416
        %v419 = vadd.f32 %v401, %v412
        %v420 = vadd.f32 %v404, %v417
        %v421 = vunpack.c.l.bf16 %v281
        %v422 = vunpack.c.l.bf16 %v282
        %v423 = vunpack.c.l.bf16 %v283
        %v425 = vrot.slane %v423, 4
        %426 = vrot.lane.b32.xlu0 %v425, 8
        %v427 = vpop.permute.xlu0 %426
        %v429 = vmax.f32 %v421, %v427
        %v430 = vmax.f32 %v422, %v427
        %v432 = vrot.slane %v430, 4
        %v434 = vmax.f32 %v429, %v432
        %v435 = vld [vmem:[%s4] sm:$0xf]
        %437 = vset.pattern.permute.xlu0 0
        %438 = vperm.xlu0 %437, %v435
        %v439 = vpop.permute.xlu0 %438
        %v440 = vrot.slane %v439, 4
        %v442 = vmul.f32 %v434, %v440
        %v443 = vld [vmem:[%s5] sm:$0xf]
        %445 = vset.pattern.permute.xlu0 0
        %446 = vperm.xlu0 %445, %v443
        %v447 = vpop.permute.xlu0 %446
        %v448 = vrot.slane %v447, 4
        %v450 = vadd.f32 %v442, %v448
        %452 = vrot.lane.b32.xlu0 %v450, 120
        %v453 = vpop.permute.xlu0 %452
        %v455 = vsel %vm362, %v420, %v453
        %v456 = vmax.f32 %v419, 0.0
        %v457 = vmax.f32 %v455, 0.0
        %vm458 = vcmask 523264
        %459 = vst.msk [vmem:[%s274] sm:$0xff] %vm458, %v456
        %460 = vst.msk [vmem:[%s274 + $0x8] sm:$0xff] %vm458, %v457
        %s461 = sand.u32 %s161, 1
        %s462 = scalar_lea.sflag [#allocation4], %s461
        %s463 = sand.u32 %s161, 1
        %s464 = smul.addr %s463, 16
        %s465 = scalar_lea.vmem [#allocation7], %s464
        // Predicated region
        $region53: #{tpu_custom_call.1} parent=43 // pred_check
          %p466 = pneg %p171
        $region54: #{tpu_custom_call.1} parent=43 // pred_check_branch
          %468 = sbr.rel (%p466) target = $region56
        $region55: #{tpu_custom_call.1} parent=43 // pred_region
          %s470 = ssub.s32 256, 256
          %471 = vsyncadd %s462, %s470
          %s472 = smul.addr %s22, 2
          %s473 = smul.addr %s472, 128
          %s474 = scalar_lea.hbm %s6, %s473
          %s475 = sshll.u32 %s465, 4
          %s476 = int_to_ptr.vmem [resolvable:$true] %s475
          %481 = dma.vmem_to_hbm [thread:$0]  %s476, 256, %s474, %s462, 128, 128, 8
        $region56: #{tpu_custom_call.1} parent=43 // pred_fallthru
          _
      $region44: #{tpu_custom_call.1} parent=5 // pred_fallthru
        _
      %p482 = scmp.le.s32.totalorder 2, %s17
      // Predicated region
      $region57: #{tpu_custom_call.1} parent=5 // pred_check
        %p483 = pneg %p482
      $region58: #{tpu_custom_call.1} parent=5 // pred_check_branch
        %485 = sbr.rel (%p483) target = $region60
      $region59: #{tpu_custom_call.1} parent=5 // pred_region
        %s486 = ssub.s32 %s17, 2
        // Predicated region
        $region61: #{tpu_custom_call.1} parent=59 // pred_check
          %p487 = pneg %p177
        $region62: #{tpu_custom_call.1} parent=59 // pred_check_branch
          %489 = sbr.rel (%p487) target = $region64
        $region63: #{tpu_custom_call.1} parent=59 // pred_region
          %s490 = sand.u32 %s162, 1
          %s491 = scalar_lea.sflag [#allocation4], %s490
          %s492 = sand.u32 %s162, 1
          %s493 = smul.addr %s492, 16
          %s494 = scalar_lea.vmem [#allocation7], %s493
          %495 = dma.done %s491, 256
        $region64: #{tpu_custom_call.1} parent=59 // pred_fallthru
          _
      $region60: #{tpu_custom_call.1} parent=5 // pred_fallthru
        _
    $region6: #{tpu_custom_call.1} parent=1 // loop_footer
      %s21 = sadd.s32 1, %s17
    $region7: #{tpu_custom_call.1} parent=1 // loop_footer_branch
      %16 = sbr.rel target = $region3
    $region8: #{tpu_custom_call.1} parent=1 // loop_exit
      _
    %496 = vsyncpa [#allocation3], 1
    %s497 = scalar_lea.sflag [#allocation3], 1
    %498 = vsyncpa %s497, 1
    %499 = vsyncpa [#allocation6], 1
    %500 = vsyncpa [#allocation4], 1
    %s501 = scalar_lea.sflag [#allocation4], 1
    %502 = vsyncpa %s501, 1

</llo_original>
